<compile_context>
chip_gen: v6e
topology: v6e:2x2x1
jax: 0.10.0
libtpu: 0.0.40
codegen_flags: <defaults>
</compile_context>

<pallas_src>
import jax
import jax.numpy as jnp
from jax.experimental import pallas as pl
from jax.experimental.pallas import tpu as pltpu

_LANE = 128
_SUBLANE_BF16 = 16          # bf16 vregs pack (16, 128); keep batch tiles % 16 == 0


def _round_up(n, m):
    return ((n + m - 1) // m) * m


def _diamond_kernel(x_ref,
                    w1_ref, b1_ref,
                    w2_ref, b2_ref,
                    w3_ref, b3_ref,
                    w4_ref, b4_ref,
                    w5_ref, b5_ref,
                    o_ref):
    """Fused 5-layer MLP (in->2in->3in->2in->in->out), ReLU after layers 1-4.

    Matmul operands are cast to the weights' dtype (bf16) so the MXU runs at
    native rate; bias-add + ReLU run once per layer on the f32 accumulator.
    Dropout is identity (eval mode).
    """
    wdt = w1_ref.dtype
    h = x_ref[...].astype(wdt)          # cast on first read; x stays unpadded in HBM

    # layer 1: in -> 2*in, ReLU
    acc = jnp.dot(h, w1_ref[...], preferred_element_type=jnp.float32) + b1_ref[...]
    h = jnp.maximum(acc, 0.0).astype(wdt)

    # layer 2: 2*in -> 3*in, ReLU (+ dropout, identity in eval mode)
    acc = jnp.dot(h, w2_ref[...], preferred_element_type=jnp.float32) + b2_ref[...]
    h = jnp.maximum(acc, 0.0).astype(wdt)

    # layer 3: 3*in -> 2*in, ReLU (+ dropout, identity in eval mode)
    acc = jnp.dot(h, w3_ref[...], preferred_element_type=jnp.float32) + b3_ref[...]
    h = jnp.maximum(acc, 0.0).astype(wdt)

    # layer 4: 2*in -> in, ReLU (+ dropout, identity in eval mode)
    acc = jnp.dot(h, w4_ref[...], preferred_element_type=jnp.float32) + b4_ref[...]
    h = jnp.maximum(acc, 0.0).astype(wdt)

    # output layer: in -> out, no activation; lane-dense store in o_ref.dtype
    acc = jnp.dot(h, w5_ref[...], preferred_element_type=jnp.float32) + b5_ref[...]
    o_ref[...] = acc.astype(o_ref.dtype)


def prepare_params(params, *, param_dtype=jnp.bfloat16):
    """Pad feature dims and cast weights for the kernel.

    Layer-1 fan-in stays at the true input_size (it is the full x feature dim,
    so a (tb, input_size) BlockSpec is legal and layer-1 K is not inflated).
    All hidden / output feature dims are zero-padded to a multiple of 128 so
    activations and the output store stay lane-dense; zero padding is exact
    through ReLU.  Weights go to bf16 for the MXU, biases stay f32.
    """
    prepared = {}
    for i in range(1, 6):
        w = params[f"w{i}"]
        b = params[f"b{i}"]
        fi, fo = w.shape
        fi_p = fi if i == 1 else _round_up(fi, _LANE)
        fo_p = _round_up(fo, _LANE)
        wp = jnp.zeros((fi_p, fo_p), param_dtype).at[:fi, :fo].set(
            w.astype(param_dtype))
        bp = jnp.zeros((1, fo_p), jnp.float32).at[:, :fo].set(
            b.astype(jnp.float32).reshape(1, fo))
        prepared[f"w{i}"] = wp
        prepared[f"b{i}"] = bp
    prepared["in_size"] = int(params["w1"].shape[0])
    prepared["out_size"] = int(params["w5"].shape[1])
    return prepared


def _tpu_vmem_capacity_bytes():
    try:
        return int(pltpu.get_tpu_info().vmem_capacity_bytes)
    except Exception:       # hardware query unavailable -> assume v7x floor
        return 64 << 20


def _resident_bytes(tb, in_size, layer_widths, out_p, weight_args,
                    x_itemsize, out_itemsize, weight_buffers):
    """Estimate resident VMEM for one grid step."""
    weight_bytes = sum(int(a.size) * a.dtype.itemsize for a in weight_args)
    io_bytes = 2 * tb * in_size * x_itemsize + 2 * tb * out_p * out_itemsize
    act_bytes = tb * sum(layer_widths) * 4        # generous f32 intermediates
    return weight_buffers * weight_bytes + io_bytes + act_bytes


def fully_connected_diamond(x, prepared, *, batch_tile=512, out_dtype=None):
    """Forward pass. x: (B, input_size); prepared: prepare_params() output."""
    B, in_size = x.shape
    assert in_size == prepared["in_size"]
    out_size = prepared["out_size"]
    out_dtype = x.dtype if out_dtype is None else jnp.dtype(out_dtype)

    weight_args = []
    for i in range(1, 6):
        weight_args += [prepared[f"w{i}"], prepared[f"b{i}"]]
    out_p = prepared["w5"].shape[1]
    layer_widths = [prepared[f"w{i}"].shape[1] for i in range(1, 6)]

    # --- batch tile -------------------------------------------------------
    # tb is the primary tuning knob: weights are grid-invariant, so growing tb
    # only adds tb * sum(widths) * 4B of activations.  Multiple of 16 (bf16
    # sublane packing); the default 512 is also a multiple of 256 for the
    # v6e/v7x 2x256^2 MXU.
    tb = max(_SUBLANE_BF16,
             min(_round_up(batch_tile, _SUBLANE_BF16),
                 _round_up(B, _SUBLANE_BF16)))
    # v7x megacore: keep >= 2 grid steps so both TensorCores get work.
    if _round_up(B, tb) // tb < 2 and B > _SUBLANE_BF16:
        tb = _round_up((B + 1) // 2, _SUBLANE_BF16)
    # VMEM feasibility (v7x: 64 MiB per TC): shrink tb until residency fits.
    vmem_cap = _tpu_vmem_capacity_bytes() - (16 << 20)   # compiler headroom
    while tb > _SUBLANE_BF16 and _resident_bytes(
            tb, in_size, layer_widths, out_p, weight_args,
            x.dtype.itemsize, out_dtype.itemsize, 1) > vmem_cap:
        tb = _round_up(tb // 2, _SUBLANE_BF16)
    # TODO(synk): for in_size >~1k on v7x even tb=16 with single-buffered
    # weights can exceed the budget; add a second "arbitrary" grid axis tiling
    # the N dim of the layer-2/3 weights instead of keeping them fully resident.

    b_pad = _round_up(B, tb)
    xp = x if b_pad == B else jnp.pad(x, ((0, b_pad - B), (0, 0)))
    grid = (b_pad // tb,)

    flops = 2 * b_pad * sum(
        int(prepared[f"w{i}"].shape[0]) * int(prepared[f"w{i}"].shape[1])
        for i in range(1, 6))
    bytes_accessed = (int(xp.size) * xp.dtype.itemsize
                      + sum(int(a.size) * a.dtype.itemsize for a in weight_args)
                      + b_pad * out_p * out_dtype.itemsize)
    cost = pl.CostEstimate(flops=int(flops), transcendentals=0,
                           bytes_accessed=int(bytes_accessed))

    def run(single_buffer_weights):
        wbuf = 1 if single_buffer_weights else 2
        est = _resident_bytes(tb, in_size, layer_widths, out_p, weight_args,
                              xp.dtype.itemsize, out_dtype.itemsize, wbuf)
        vmem_limit = max(min(int(est * 1.25) + (4 << 20), vmem_cap), 32 << 20)

        def wspec(shape):
            if single_buffer_weights:
                # Constant index_map => block never changes across the grid;
                # single buffering halves resident weight VMEM (matters most on
                # v7x's 64 MiB per-core VMEM).
                return pl.BlockSpec(shape, lambda i: (0, 0),
                                    pipeline_mode=pl.Buffered(1))
            return pl.BlockSpec(shape, lambda i: (0, 0))

        in_specs = [pl.BlockSpec((tb, in_size), lambda i: (i, 0))]
        in_specs += [wspec(a.shape) for a in weight_args]
        out_specs = pl.BlockSpec((tb, out_p), lambda i: (i, 0))

        return pl.pallas_call(
            _diamond_kernel,
            out_shape=jax.ShapeDtypeStruct((b_pad, out_p), out_dtype),
            grid_spec=pltpu.PrefetchScalarGridSpec(
                num_scalar_prefetch=0,
                grid=grid,
                in_specs=in_specs,
                out_specs=out_specs),
            compiler_params=pltpu.CompilerParams(
                dimension_semantics=("parallel",),
                vmem_limit_bytes=int(vmem_limit)),
            cost_estimate=cost,
        )(xp, *weight_args)

    # Single-buffered weights are the intended path; fall back to default
    # double-buffered weight specs only on an explicit, enumerated rejection of
    # pl.Buffered(1) (lowering / validation), not on arbitrary errors.
    fallback_errors = tuple(e for e in (
        pltpu.LoweringException, ValueError, NotImplementedError, TypeError,
        getattr(jax.errors, "JaxRuntimeError", None)) if e is not None)
    try:
        yp = run(single_buffer_weights=True)
    except fallback_errors:
        yp = run(single_buffer_weights=False)

    return yp[:B, :out_size]


def init_params(key, input_size, output_size):
    """Parameter init matching the module's layer shapes.

    PyTorch nn.Linear stores weight as (out, in); we store the transpose
    (in, out) so the kernel computes x @ W directly. Biases stored as (1, out).
    """
    dims = [
        (input_size, input_size * 2),      # input_layer
        (input_size * 2, input_size * 3),  # hidden_layer_1
        (input_size * 3, input_size * 2),  # hidden_layer_2
        (input_size * 2, input_size),      # hidden_layer_3
        (input_size, output_size),         # output_layer
    ]
    params = {}
    for i, (fan_in, fan_out) in enumerate(dims, start=1):
        key, kw, kb = jax.random.split(key, 3)
        bound = 1.0 / jnp.sqrt(fan_in)     # same scale as PyTorch default init
        params[f"w{i}"] = jax.random.uniform(
            kw, (fan_in, fan_out), jnp.float32, -bound, bound)
        params[f"b{i}"] = jax.random.uniform(
            kb, (1, fan_out), jnp.float32, -bound, bound)
    return params


def reference_forward(x, params):
    h = x
    for i in range(1, 5):
        h = jnp.maximum(h @ params[f"w{i}"] + params[f"b{i}"], 0.0)
    return h @ params["w5"] + params["b5"]


if __name__ == "__main__":
    input_size = 32
    output_size = 8
    batch = 27   # deliberately ragged: exercises batch-tail padding

    key = jax.random.PRNGKey(0)
    kx, kp = jax.random.split(key)
    x = jax.random.normal(kx, (batch, input_size), jnp.float32)
    params = init_params(kp, input_size, output_size)
    prepared = prepare_params(params)

    # Default batch_tile; the >=2-grid-steps rule splits this small batch into
    # two 16-row tiles so the pipelined multi-step path is exercised.
    out = fully_connected_diamond(x, prepared)
    out = jax.block_until_ready(out)

    ref = reference_forward(x, params)
    assert out.shape == (batch, output_size)
    assert out.dtype == x.dtype
    # bf16 matmul inputs with f32 accumulation -> relaxed tolerance vs f32 ref.
    assert jnp.allclose(out, ref, atol=5e-2, rtol=5e-2), \
        float(jnp.max(jnp.abs(out - ref)))

    print("KERNEL_OK")
</pallas_src>

<mosaic_0001>
module attributes {stable_mosaic.version = 11 : i64} {
  func.func @_diamond_kernel(%arg0: i32, %arg1: memref<16x32xf32, #tpu.memory_space<vmem>>, %arg2: memref<32x128xbf16, #tpu.memory_space<vmem>>, %arg3: memref<1x128xf32, #tpu.memory_space<vmem>>, %arg4: memref<128x128xbf16, #tpu.memory_space<vmem>>, %arg5: memref<1x128xf32, #tpu.memory_space<vmem>>, %arg6: memref<128x128xbf16, #tpu.memory_space<vmem>>, %arg7: memref<1x128xf32, #tpu.memory_space<vmem>>, %arg8: memref<128x128xbf16, #tpu.memory_space<vmem>>, %arg9: memref<1x128xf32, #tpu.memory_space<vmem>>, %arg10: memref<128x128xbf16, #tpu.memory_space<vmem>>, %arg11: memref<1x128xf32, #tpu.memory_space<vmem>>, %arg12: memref<16x128xf32, #tpu.memory_space<vmem>>) attributes {dimension_semantics = [#tpu.dimension_semantics<parallel>], iteration_bounds = array<i64: 2>, scalar_prefetch = 0 : i64, scratch_operands = 0 : i64, tpu.core_type = #tpu.core_type<tc>, window_params = [{transform_indices = @transform_0, window_bounds = array<i64: 16, 32>}, {pipeline_mode = #tpu.pipeline_mode<synchronous>, transform_indices = @transform_1, window_bounds = array<i64: 32, 128>}, {pipeline_mode = #tpu.pipeline_mode<synchronous>, transform_indices = @transform_2, window_bounds = array<i64: 1, 128>}, {pipeline_mode = #tpu.pipeline_mode<synchronous>, transform_indices = @transform_3, window_bounds = array<i64: 128, 128>}, {pipeline_mode = #tpu.pipeline_mode<synchronous>, transform_indices = @transform_4, window_bounds = array<i64: 1, 128>}, {pipeline_mode = #tpu.pipeline_mode<synchronous>, transform_indices = @transform_5, window_bounds = array<i64: 128, 128>}, {pipeline_mode = #tpu.pipeline_mode<synchronous>, transform_indices = @transform_6, window_bounds = array<i64: 1, 128>}, {pipeline_mode = #tpu.pipeline_mode<synchronous>, transform_indices = @transform_7, window_bounds = array<i64: 128, 128>}, {pipeline_mode = #tpu.pipeline_mode<synchronous>, transform_indices = @transform_8, window_bounds = array<i64: 1, 128>}, {pipeline_mode = #tpu.pipeline_mode<synchronous>, transform_indices = @transform_9, window_bounds = array<i64: 128, 128>}, {pipeline_mode = #tpu.pipeline_mode<synchronous>, transform_indices = @transform_10, window_bounds = array<i64: 1, 128>}, {transform_indices = @transform_11, window_bounds = array<i64: 16, 128>}]} {
    %c0 = arith.constant 0 : index
    %c0_0 = arith.constant 0 : index
    %0 = vector.load %arg1[%c0, %c0_0] : memref<16x32xf32, #tpu.memory_space<vmem>>, vector<16x32xf32>
    %1 = arith.truncf %0 : vector<16x32xf32> to vector<16x32xbf16>
    %c0_1 = arith.constant 0 : index
    %c0_2 = arith.constant 0 : index
    %2 = vector.load %arg2[%c0_1, %c0_2] : memref<32x128xbf16, #tpu.memory_space<vmem>>, vector<32x128xbf16>
    %cst = arith.constant dense<0.000000e+00> : vector<16x128xf32>
    %3 = tpu.matmul %1, %2, %cst {dimension_numbers = #tpu.dot_dimension_numbers<[1], [0], [0], [1], [0, 0, 1, 1], [], []>} : vector<16x32xbf16>, vector<32x128xbf16>, vector<16x128xf32> -> vector<16x128xf32>
    %c0_3 = arith.constant 0 : index
    %c0_4 = arith.constant 0 : index
    %4 = vector.load %arg3[%c0_3, %c0_4] : memref<1x128xf32, #tpu.memory_space<vmem>>, vector<1x128xf32>
    %5 = vector.broadcast %4 : vector<1x128xf32> to vector<16x128xf32>
    %6 = arith.addf %3, %5 : vector<16x128xf32>
    %cst_5 = arith.constant 0.000000e+00 : f32
    %7 = vector.broadcast %cst_5 : f32 to vector<16x128xf32>
    %8 = arith.maximumf %6, %7 : vector<16x128xf32>
    %9 = arith.truncf %8 : vector<16x128xf32> to vector<16x128xbf16>
    %c0_6 = arith.constant 0 : index
    %c0_7 = arith.constant 0 : index
    %10 = vector.load %arg4[%c0_6, %c0_7] : memref<128x128xbf16, #tpu.memory_space<vmem>>, vector<128x128xbf16>
    %cst_8 = arith.constant dense<0.000000e+00> : vector<16x128xf32>
    %11 = tpu.matmul %9, %10, %cst_8 {dimension_numbers = #tpu.dot_dimension_numbers<[1], [0], [0], [1], [0, 0, 1, 1], [], []>} : vector<16x128xbf16>, vector<128x128xbf16>, vector<16x128xf32> -> vector<16x128xf32>
    %c0_9 = arith.constant 0 : index
    %c0_10 = arith.constant 0 : index
    %12 = vector.load %arg5[%c0_9, %c0_10] : memref<1x128xf32, #tpu.memory_space<vmem>>, vector<1x128xf32>
    %13 = vector.broadcast %12 : vector<1x128xf32> to vector<16x128xf32>
    %14 = arith.addf %11, %13 : vector<16x128xf32>
    %cst_11 = arith.constant 0.000000e+00 : f32
    %15 = vector.broadcast %cst_11 : f32 to vector<16x128xf32>
    %16 = arith.maximumf %14, %15 : vector<16x128xf32>
    %17 = arith.truncf %16 : vector<16x128xf32> to vector<16x128xbf16>
    %c0_12 = arith.constant 0 : index
    %c0_13 = arith.constant 0 : index
    %18 = vector.load %arg6[%c0_12, %c0_13] : memref<128x128xbf16, #tpu.memory_space<vmem>>, vector<128x128xbf16>
    %cst_14 = arith.constant dense<0.000000e+00> : vector<16x128xf32>
    %19 = tpu.matmul %17, %18, %cst_14 {dimension_numbers = #tpu.dot_dimension_numbers<[1], [0], [0], [1], [0, 0, 1, 1], [], []>} : vector<16x128xbf16>, vector<128x128xbf16>, vector<16x128xf32> -> vector<16x128xf32>
    %c0_15 = arith.constant 0 : index
    %c0_16 = arith.constant 0 : index
    %20 = vector.load %arg7[%c0_15, %c0_16] : memref<1x128xf32, #tpu.memory_space<vmem>>, vector<1x128xf32>
    %21 = vector.broadcast %20 : vector<1x128xf32> to vector<16x128xf32>
    %22 = arith.addf %19, %21 : vector<16x128xf32>
    %cst_17 = arith.constant 0.000000e+00 : f32
    %23 = vector.broadcast %cst_17 : f32 to vector<16x128xf32>
    %24 = arith.maximumf %22, %23 : vector<16x128xf32>
    %25 = arith.truncf %24 : vector<16x128xf32> to vector<16x128xbf16>
    %c0_18 = arith.constant 0 : index
    %c0_19 = arith.constant 0 : index
    %26 = vector.load %arg8[%c0_18, %c0_19] : memref<128x128xbf16, #tpu.memory_space<vmem>>, vector<128x128xbf16>
    %cst_20 = arith.constant dense<0.000000e+00> : vector<16x128xf32>
    %27 = tpu.matmul %25, %26, %cst_20 {dimension_numbers = #tpu.dot_dimension_numbers<[1], [0], [0], [1], [0, 0, 1, 1], [], []>} : vector<16x128xbf16>, vector<128x128xbf16>, vector<16x128xf32> -> vector<16x128xf32>
    %c0_21 = arith.constant 0 : index
    %c0_22 = arith.constant 0 : index
    %28 = vector.load %arg9[%c0_21, %c0_22] : memref<1x128xf32, #tpu.memory_space<vmem>>, vector<1x128xf32>
    %29 = vector.broadcast %28 : vector<1x128xf32> to vector<16x128xf32>
    %30 = arith.addf %27, %29 : vector<16x128xf32>
    %cst_23 = arith.constant 0.000000e+00 : f32
    %31 = vector.broadcast %cst_23 : f32 to vector<16x128xf32>
    %32 = arith.maximumf %30, %31 : vector<16x128xf32>
    %33 = arith.truncf %32 : vector<16x128xf32> to vector<16x128xbf16>
    %c0_24 = arith.constant 0 : index
    %c0_25 = arith.constant 0 : index
    %34 = vector.load %arg10[%c0_24, %c0_25] : memref<128x128xbf16, #tpu.memory_space<vmem>>, vector<128x128xbf16>
    %cst_26 = arith.constant dense<0.000000e+00> : vector<16x128xf32>
    %35 = tpu.matmul %33, %34, %cst_26 {dimension_numbers = #tpu.dot_dimension_numbers<[1], [0], [0], [1], [0, 0, 1, 1], [], []>} : vector<16x128xbf16>, vector<128x128xbf16>, vector<16x128xf32> -> vector<16x128xf32>
    %c0_27 = arith.constant 0 : index
    %c0_28 = arith.constant 0 : index
    %36 = vector.load %arg11[%c0_27, %c0_28] : memref<1x128xf32, #tpu.memory_space<vmem>>, vector<1x128xf32>
    %37 = vector.broadcast %36 : vector<1x128xf32> to vector<16x128xf32>
    %38 = arith.addf %35, %37 : vector<16x128xf32>
    %c0_29 = arith.constant 0 : index
    %c0_30 = arith.constant 0 : index
    %39 = vector.load %arg12[%c0_29, %c0_30] : memref<16x128xf32, #tpu.memory_space<vmem>>, vector<16x128xf32>
    tpu.vector_store %arg12[%c0_29, %c0_30], %38 {strides = array<i32>} : memref<16x128xf32, #tpu.memory_space<vmem>>, vector<16x128xf32>,
    return
  }
  func.func @transform_0(%arg0: i32) -> (i32, i32) {
    %c0_i32 = arith.constant 0 : i32
    %c0_i32_0 = arith.constant 0 : i32
    return %arg0, %c0_i32 : i32, i32
  }
  func.func @transform_1(%arg0: i32) -> (i32, i32) {
    %c0_i32 = arith.constant 0 : i32
    %c0_i32_0 = arith.constant 0 : i32
    %c0_i32_1 = arith.constant 0 : i32
    return %c0_i32, %c0_i32_0 : i32, i32
  }
  func.func @transform_2(%arg0: i32) -> (i32, i32) {
    %c0_i32 = arith.constant 0 : i32
    %c0_i32_0 = arith.constant 0 : i32
    %c0_i32_1 = arith.constant 0 : i32
    return %c0_i32, %c0_i32_0 : i32, i32
  }
  func.func @transform_3(%arg0: i32) -> (i32, i32) {
    %c0_i32 = arith.constant 0 : i32
    %c0_i32_0 = arith.constant 0 : i32
    %c0_i32_1 = arith.constant 0 : i32
    return %c0_i32, %c0_i32_0 : i32, i32
  }
  func.func @transform_4(%arg0: i32) -> (i32, i32) {
    %c0_i32 = arith.constant 0 : i32
    %c0_i32_0 = arith.constant 0 : i32
    %c0_i32_1 = arith.constant 0 : i32
    return %c0_i32, %c0_i32_0 : i32, i32
  }
  func.func @transform_5(%arg0: i32) -> (i32, i32) {
    %c0_i32 = arith.constant 0 : i32
    %c0_i32_0 = arith.constant 0 : i32
    %c0_i32_1 = arith.constant 0 : i32
    return %c0_i32, %c0_i32_0 : i32, i32
  }
  func.func @transform_6(%arg0: i32) -> (i32, i32) {
    %c0_i32 = arith.constant 0 : i32
    %c0_i32_0 = arith.constant 0 : i32
    %c0_i32_1 = arith.constant 0 : i32
    return %c0_i32, %c0_i32_0 : i32, i32
  }
  func.func @transform_7(%arg0: i32) -> (i32, i32) {
    %c0_i32 = arith.constant 0 : i32
    %c0_i32_0 = arith.constant 0 : i32
    %c0_i32_1 = arith.constant 0 : i32
    return %c0_i32, %c0_i32_0 : i32, i32
  }
  func.func @transform_8(%arg0: i32) -> (i32, i32) {
    %c0_i32 = arith.constant 0 : i32
    %c0_i32_0 = arith.constant 0 : i32
    %c0_i32_1 = arith.constant 0 : i32
    return %c0_i32, %c0_i32_0 : i32, i32
  }
  func.func @transform_9(%arg0: i32) -> (i32, i32) {
    %c0_i32 = arith.constant 0 : i32
    %c0_i32_0 = arith.constant 0 : i32
    %c0_i32_1 = arith.constant 0 : i32
    return %c0_i32, %c0_i32_0 : i32, i32
  }
  func.func @transform_10(%arg0: i32) -> (i32, i32) {
    %c0_i32 = arith.constant 0 : i32
    %c0_i32_0 = arith.constant 0 : i32
    %c0_i32_1 = arith.constant 0 : i32
    return %c0_i32, %c0_i32_0 : i32, i32
  }
  func.func @transform_11(%arg0: i32) -> (i32, i32) {
    %c0_i32 = arith.constant 0 : i32
    %c0_i32_0 = arith.constant 0 : i32
    return %arg0, %c0_i32 : i32, i32
  }
}

</mosaic_0001>

<llo_original>
// kernel: tpu_custom_call.1
$region0: #{tpu_custom_call.1}
  #allocation0 [shape = 'u32[]', space=smem, size = 0x4, offset = 0x4, fixed_abs, tag = 'smem constant byte address 0x4 - core index']
  #allocation1 [shape = 'u32[144,128]{1,0:T(1,128)}', space=vmem, size = 0x12000, scoped, tag = 'internal scratch']
  %s0 = inlined_call_operand.hbm [shape: f32[32,32], index: 0, kind: input, shape index: {}]
  %s1 = inlined_call_operand.hbm [shape: bf16[32,128], index: 1, kind: input, shape index: {}]
  %s2 = inlined_call_operand.vmem [shape: f32[1,128], index: 2, kind: input, shape index: {}]
  %s3 = inlined_call_operand.hbm [shape: bf16[128,128], index: 3, kind: input, shape index: {}]
  %s4 = inlined_call_operand.vmem [shape: f32[1,128], index: 4, kind: input, shape index: {}]
  %s5 = inlined_call_operand.hbm [shape: bf16[128,128], index: 5, kind: input, shape index: {}]
  %s6 = inlined_call_operand.vmem [shape: f32[1,128], index: 6, kind: input, shape index: {}]
  %s7 = inlined_call_operand.hbm [shape: bf16[128,128], index: 7, kind: input, shape index: {}]
  %s8 = inlined_call_operand.vmem [shape: f32[1,128], index: 8, kind: input, shape index: {}]
  %s9 = inlined_call_operand.hbm [shape: bf16[128,128], index: 9, kind: input, shape index: {}]
  %s10 = inlined_call_operand.vmem [shape: f32[1,128], index: 10, kind: input, shape index: {}]
  %s11 = inlined_call_operand.hbm [shape: f32[32,128], index: 11, kind: output, shape index: {}]
  %s12 = sld [smem:[#allocation0]]
  $region101: #{tpu_custom_call.1} parent=0
    _
  %s14 = ssub.s32 1, %s12
  %s15 = scalar_select 0, %s14, %s12
  $region1: #{tpu_custom_call.1} parent=0
    #allocation2 [shape = 'u8[16384]{0}', space=vmem, size = 0x4000, scoped, tag = 'input window, operand 0']
    #allocation3 [shape = 's32[2]{0}', space=sflag, size = 0x8, scoped, tag = 'scoped memory for tpu_custom_call.1']
    #allocation4 [shape = 's32[2]{0}', space=sflag, size = 0x8, scoped, tag = 'scoped memory for tpu_custom_call.1']
    #allocation5 [shape = 'u8[8192]{0}', space=vmem, size = 0x2000, scoped, tag = 'input window, operand 1, single buffered']
    #allocation6 [shape = 's32[1]{0}', space=sflag, size = 0x4, scoped, tag = 'scoped memory for tpu_custom_call.1']
    #allocation7 [shape = 'u8[32768]{0}', space=vmem, size = 0x8000, scoped, tag = 'input window, operand 3, single buffered']
    #allocation8 [shape = 'u8[32768]{0}', space=vmem, size = 0x8000, scoped, tag = 'input window, operand 5, single buffered']
    #allocation9 [shape = 's32[1]{0}', space=sflag, size = 0x4, scoped, tag = 'scoped memory for tpu_custom_call.1']
    #allocation10 [shape = 'u8[32768]{0}', space=vmem, size = 0x8000, scoped, tag = 'input window, operand 7, single buffered']
    #allocation11 [shape = 'u8[32768]{0}', space=vmem, size = 0x8000, scoped, tag = 'input window, operand 9, single buffered']
    #allocation12 [shape = 's32[1]{0}', space=sflag, size = 0x4, scoped, tag = 'scoped memory for tpu_custom_call.1']
    #allocation13 [shape = 'u8[16384]{0}', space=vmem, size = 0x4000, scoped, tag = 'output window, operand 0']
    %16 = vsyncpa [#allocation3], 0
    %s17 = scalar_lea.sflag [#allocation3], 1
    %18 = vsyncpa %s17, 0
    %19 = vsyncpa [#allocation6], 0
    %20 = vsyncpa [#allocation9], 0
    %21 = vsyncpa [#allocation12], 0
    %22 = vsyncpa [#allocation4], 0
    %s23 = scalar_lea.sflag [#allocation4], 1
    %24 = vsyncpa %s23, 0
    loop: start=0, step=1, limit=4
    $region2: #{tpu_custom_call.1} parent=1 // loop_pre_header
      _
    $region3: #{tpu_custom_call.1} parent=1 // loop_header
      %s26 = sphi 0, %s30
      %p27 = scmp.ge.s32.totalorder %s26, 4
      %s36 = sphi 0, %s38
      %s39 = sphi 0, %s36
      %s40 = sphi 0, %s39
      %s56 = sphi 0, %s40
      %s60 = sphi 0, %s60
      %s62 = sphi 0, %s60
      %s63 = sphi 0, %s62
      %s77 = sphi 0, %s63
      %s81 = sphi 0, %s81
      %s83 = sphi 0, %s81
      %s84 = sphi 0, %s83
      %s98 = sphi 0, %s84
      %s102 = sphi 0, %s102
      %s104 = sphi 0, %s102
      %s105 = sphi 0, %s104
      %s119 = sphi 0, %s105
      %s123 = sphi 0, %s123
      %s125 = sphi 0, %s123
      %s126 = sphi 0, %s125
      %s140 = sphi 0, %s126
      %s144 = sphi 0, %s144
      %s146 = sphi 0, %s144
      %s147 = sphi 0, %s146
      %s161 = sphi 0, %s147
      %s165 = sphi 0, %s165
      %s167 = sphi 0, %s165
      %s168 = sphi 0, %s167
      %s182 = sphi 0, %s168
      %s186 = sphi 0, %s186
      %s188 = sphi 0, %s186
      %s189 = sphi 0, %s188
      %s203 = sphi 0, %s189
      %s207 = sphi 0, %s207
      %s209 = sphi 0, %s207
      %s210 = sphi 0, %s209
      %s224 = sphi 0, %s210
      %s228 = sphi 0, %s228
      %s230 = sphi 0, %s228
      %s231 = sphi 0, %s230
      %s245 = sphi 0, %s231
      %s249 = sphi 0, %s249
      %s251 = sphi 0, %s249
      %s252 = sphi 0, %s251
      %s266 = sphi 0, %s252
      %s272 = sphi 0, %s274
      %s275 = sphi 0, %s272
      %s276 = sphi 0, %s275
      %s292 = sphi 0, %s276
    $region4: #{tpu_custom_call.1} parent=1 // loop_header_branch
      %29 = sbr.rel (%p27) target = $region8
    $region5: #{tpu_custom_call.1} parent=1 // loop_body
      %s31 = ssub.s32 %s26, 1
      %s32 = ssub.s32 %s26, 2
      %s33 = sadd.s32 %s26, 1
      %s34 = ssub.s32 %s26, %s33
      %p35 = scmp.eq.s32.totalorder %s34, 0
      %s37 = sadd.s32 %s36, 1
      %s38 = scalar_select %p35, %s36, %s37
      %p41 = pneg %p35
      %p42 = scmp.eq.s32.totalorder %s26, 1
      %p43 = por %p41, %p42
      %p44 = scmp.ne.s32.totalorder %s36, %s39
      %p45 = scmp.eq.s32.totalorder %s26, 0
      %p46 = por %p44, %p45
      %p47 = scmp.ne.s32.totalorder %s36, %s39
      %p48 = scmp.eq.s32.totalorder %s31, 1
      %p49 = por %p47, %p48
      %p50 = scmp.ne.s32.totalorder %s39, %s40
      %p51 = scmp.eq.s32.totalorder %s31, 0
      %p52 = por %p50, %p51
      %p53 = scmp.ne.s32.totalorder %s39, %s40
      %p54 = scmp.eq.s32.totalorder %s32, 1
      %p55 = por %p53, %p54
      %p57 = scmp.ne.s32.totalorder %s40, %s56
      %p58 = scmp.eq.s32.totalorder %s32, 0
      %p59 = por %p57, %p58
      %s61 = sadd.s32 %s60, 1
      %p64 = scmp.eq.s32.totalorder %s26, 1
      %p65 = scmp.ne.s32.totalorder %s60, %s62
      %p66 = scmp.eq.s32.totalorder %s26, 0
      %p67 = por %p65, %p66
      %p68 = scmp.ne.s32.totalorder %s60, %s62
      %p69 = scmp.eq.s32.totalorder %s31, 1
      %p70 = por %p68, %p69
      %p71 = scmp.ne.s32.totalorder %s62, %s63
      %p72 = scmp.eq.s32.totalorder %s31, 0
      %p73 = por %p71, %p72
      %p74 = scmp.ne.s32.totalorder %s62, %s63
      %p75 = scmp.eq.s32.totalorder %s32, 1
      %p76 = por %p74, %p75
      %p78 = scmp.ne.s32.totalorder %s63, %s77
      %p79 = scmp.eq.s32.totalorder %s32, 0
      %p80 = por %p78, %p79
      %s82 = sadd.s32 %s81, 1
      %p85 = scmp.eq.s32.totalorder %s26, 1
      %p86 = scmp.ne.s32.totalorder %s81, %s83
      %p87 = scmp.eq.s32.totalorder %s26, 0
      %p88 = por %p86, %p87
      %p89 = scmp.ne.s32.totalorder %s81, %s83
      %p90 = scmp.eq.s32.totalorder %s31, 1
      %p91 = por %p89, %p90
      %p92 = scmp.ne.s32.totalorder %s83, %s84
      %p93 = scmp.eq.s32.totalorder %s31, 0
      %p94 = por %p92, %p93
      %p95 = scmp.ne.s32.totalorder %s83, %s84
      %p96 = scmp.eq.s32.totalorder %s32, 1
      %p97 = por %p95, %p96
      %p99 = scmp.ne.s32.totalorder %s84, %s98
      %p100 = scmp.eq.s32.totalorder %s32, 0
      %p101 = por %p99, %p100
      %s103 = sadd.s32 %s102, 1
      %p106 = scmp.eq.s32.totalorder %s26, 1
      %p107 = scmp.ne.s32.totalorder %s102, %s104
      %p108 = scmp.eq.s32.totalorder %s26, 0
      %p109 = por %p107, %p108
      %p110 = scmp.ne.s32.totalorder %s102, %s104
      %p111 = scmp.eq.s32.totalorder %s31, 1
      %p112 = por %p110, %p111
      %p113 = scmp.ne.s32.totalorder %s104, %s105
      %p114 = scmp.eq.s32.totalorder %s31, 0
      %p115 = por %p113, %p114
      %p116 = scmp.ne.s32.totalorder %s104, %s105
      %p117 = scmp.eq.s32.totalorder %s32, 1
      %p118 = por %p116, %p117
      %p120 = scmp.ne.s32.totalorder %s105, %s119
      %p121 = scmp.eq.s32.totalorder %s32, 0
      %p122 = por %p120, %p121
      %s124 = sadd.s32 %s123, 1
      %p127 = scmp.eq.s32.totalorder %s26, 1
      %p128 = scmp.ne.s32.totalorder %s123, %s125
      %p129 = scmp.eq.s32.totalorder %s26, 0
      %p130 = por %p128, %p129
      %p131 = scmp.ne.s32.totalorder %s123, %s125
      %p132 = scmp.eq.s32.totalorder %s31, 1
      %p133 = por %p131, %p132
      %p134 = scmp.ne.s32.totalorder %s125, %s126
      %p135 = scmp.eq.s32.totalorder %s31, 0
      %p136 = por %p134, %p135
      %p137 = scmp.ne.s32.totalorder %s125, %s126
      %p138 = scmp.eq.s32.totalorder %s32, 1
      %p139 = por %p137, %p138
      %p141 = scmp.ne.s32.totalorder %s126, %s140
      %p142 = scmp.eq.s32.totalorder %s32, 0
      %p143 = por %p141, %p142
      %s145 = sadd.s32 %s144, 1
      %p148 = scmp.eq.s32.totalorder %s26, 1
      %p149 = scmp.ne.s32.totalorder %s144, %s146
      %p150 = scmp.eq.s32.totalorder %s26, 0
      %p151 = por %p149, %p150
      %p152 = scmp.ne.s32.totalorder %s144, %s146
      %p153 = scmp.eq.s32.totalorder %s31, 1
      %p154 = por %p152, %p153
      %p155 = scmp.ne.s32.totalorder %s146, %s147
      %p156 = scmp.eq.s32.totalorder %s31, 0
      %p157 = por %p155, %p156
      %p158 = scmp.ne.s32.totalorder %s146, %s147
      %p159 = scmp.eq.s32.totalorder %s32, 1
      %p160 = por %p158, %p159
      %p162 = scmp.ne.s32.totalorder %s147, %s161
      %p163 = scmp.eq.s32.totalorder %s32, 0
      %p164 = por %p162, %p163
      %s166 = sadd.s32 %s165, 1
      %p169 = scmp.eq.s32.totalorder %s26, 1
      %p170 = scmp.ne.s32.totalorder %s165, %s167
      %p171 = scmp.eq.s32.totalorder %s26, 0
      %p172 = por %p170, %p171
      %p173 = scmp.ne.s32.totalorder %s165, %s167
      %p174 = scmp.eq.s32.totalorder %s31, 1
      %p175 = por %p173, %p174
      %p176 = scmp.ne.s32.totalorder %s167, %s168
      %p177 = scmp.eq.s32.totalorder %s31, 0
      %p178 = por %p176, %p177
      %p179 = scmp.ne.s32.totalorder %s167, %s168
      %p180 = scmp.eq.s32.totalorder %s32, 1
      %p181 = por %p179, %p180
      %p183 = scmp.ne.s32.totalorder %s168, %s182
      %p184 = scmp.eq.s32.totalorder %s32, 0
      %p185 = por %p183, %p184
      %s187 = sadd.s32 %s186, 1
      %p190 = scmp.eq.s32.totalorder %s26, 1
      %p191 = scmp.ne.s32.totalorder %s186, %s188
      %p192 = scmp.eq.s32.totalorder %s26, 0
      %p193 = por %p191, %p192
      %p194 = scmp.ne.s32.totalorder %s186, %s188
      %p195 = scmp.eq.s32.totalorder %s31, 1
      %p196 = por %p194, %p195
      %p197 = scmp.ne.s32.totalorder %s188, %s189
      %p198 = scmp.eq.s32.totalorder %s31, 0
      %p199 = por %p197, %p198
      %p200 = scmp.ne.s32.totalorder %s188, %s189
      %p201 = scmp.eq.s32.totalorder %s32, 1
      %p202 = por %p200, %p201
      %p204 = scmp.ne.s32.totalorder %s189, %s203
      %p205 = scmp.eq.s32.totalorder %s32, 0
      %p206 = por %p204, %p205
      %s208 = sadd.s32 %s207, 1
      %p211 = scmp.eq.s32.totalorder %s26, 1
      %p212 = scmp.ne.s32.totalorder %s207, %s209
      %p213 = scmp.eq.s32.totalorder %s26, 0
      %p214 = por %p212, %p213
      %p215 = scmp.ne.s32.totalorder %s207, %s209
      %p216 = scmp.eq.s32.totalorder %s31, 1
      %p217 = por %p215, %p216
      %p218 = scmp.ne.s32.totalorder %s209, %s210
      %p219 = scmp.eq.s32.totalorder %s31, 0
      %p220 = por %p218, %p219
      %p221 = scmp.ne.s32.totalorder %s209, %s210
      %p222 = scmp.eq.s32.totalorder %s32, 1
      %p223 = por %p221, %p222
      %p225 = scmp.ne.s32.totalorder %s210, %s224
      %p226 = scmp.eq.s32.totalorder %s32, 0
      %p227 = por %p225, %p226
      %s229 = sadd.s32 %s228, 1
      %p232 = scmp.eq.s32.totalorder %s26, 1
      %p233 = scmp.ne.s32.totalorder %s228, %s230
      %p234 = scmp.eq.s32.totalorder %s26, 0
      %p235 = por %p233, %p234
      %p236 = scmp.ne.s32.totalorder %s228, %s230
      %p237 = scmp.eq.s32.totalorder %s31, 1
      %p238 = por %p236, %p237
      %p239 = scmp.ne.s32.totalorder %s230, %s231
      %p240 = scmp.eq.s32.totalorder %s31, 0
      %p241 = por %p239, %p240
      %p242 = scmp.ne.s32.totalorder %s230, %s231
      %p243 = scmp.eq.s32.totalorder %s32, 1
      %p244 = por %p242, %p243
      %p246 = scmp.ne.s32.totalorder %s231, %s245
      %p247 = scmp.eq.s32.totalorder %s32, 0
      %p248 = por %p246, %p247
      %s250 = sadd.s32 %s249, 1
      %p253 = scmp.eq.s32.totalorder %s26, 1
      %p254 = scmp.ne.s32.totalorder %s249, %s251
      %p255 = scmp.eq.s32.totalorder %s26, 0
      %p256 = por %p254, %p255
      %p257 = scmp.ne.s32.totalorder %s249, %s251
      %p258 = scmp.eq.s32.totalorder %s31, 1
      %p259 = por %p257, %p258
      %p260 = scmp.ne.s32.totalorder %s251, %s252
      %p261 = scmp.eq.s32.totalorder %s31, 0
      %p262 = por %p260, %p261
      %p263 = scmp.ne.s32.totalorder %s251, %s252
      %p264 = scmp.eq.s32.totalorder %s32, 1
      %p265 = por %p263, %p264
      %p267 = scmp.ne.s32.totalorder %s252, %s266
      %p268 = scmp.eq.s32.totalorder %s32, 0
      %p269 = por %p267, %p268
      %s270 = ssub.s32 %s26, %s33
      %p271 = scmp.eq.s32.totalorder %s270, 0
      %s273 = sadd.s32 %s272, 1
      %s274 = scalar_select %p271, %s272, %s273
      %p277 = pneg %p271
      %p278 = scmp.eq.s32.totalorder %s26, 1
      %p279 = por %p277, %p278
      %p280 = scmp.ne.s32.totalorder %s272, %s275
      %p281 = scmp.eq.s32.totalorder %s26, 0
      %p282 = por %p280, %p281
      %p283 = scmp.ne.s32.totalorder %s272, %s275
      %p284 = scmp.eq.s32.totalorder %s31, 1
      %p285 = por %p283, %p284
      %p286 = scmp.ne.s32.totalorder %s275, %s276
      %p287 = scmp.eq.s32.totalorder %s31, 0
      %p288 = por %p286, %p287
      %p289 = scmp.ne.s32.totalorder %s275, %s276
      %p290 = scmp.eq.s32.totalorder %s32, 1
      %p291 = por %p289, %p290
      %p293 = scmp.ne.s32.totalorder %s276, %s292
      %p294 = scmp.eq.s32.totalorder %s32, 0
      %p295 = por %p293, %p294
      %p296 = scmp.le.s32.totalorder 1, %s26
      %p297 = scmp.lt.s32.totalorder %s26, 3
      %p298 = pnand %p296, %p297
      %p299 = pneg %p298
      // Predicated region
      $region9: #{tpu_custom_call.1} parent=5 // pred_check
        _
      $region10: #{tpu_custom_call.1} parent=5 // pred_check_branch
        %301 = sbr.rel (%p298) target = $region12
      $region11: #{tpu_custom_call.1} parent=5 // pred_region
        %s302 = ssub.s32 %s26, 1
        // Predicated region
        $region13: #{tpu_custom_call.1} parent=11 // pred_check
          %p303 = pneg %p73
        $region14: #{tpu_custom_call.1} parent=11 // pred_check_branch
          %305 = sbr.rel (%p303) target = $region16
        $region15: #{tpu_custom_call.1} parent=11 // pred_region
          %s307 = ssub.s32 256, 256
          %308 = vsyncadd [#allocation6], %s307
          %s309 = sshll.u32 [#allocation5], 4
          %s310 = int_to_ptr.vmem [resolvable:$true] %s309
          %315 = dma.hbm_to_vmem [thread:$0]  %s1, 256, %s310, [#allocation6], 64, 64, 4
        $region16: #{tpu_custom_call.1} parent=11 // pred_fallthru
          _
        // Predicated region
        $region17: #{tpu_custom_call.1} parent=11 // pred_check
          %p316 = pneg %p94
        $region18: #{tpu_custom_call.1} parent=11 // pred_check_branch
          %318 = sbr.rel (%p316) target = $region20
        $region19: #{tpu_custom_call.1} parent=11 // pred_region
          _
        $region20: #{tpu_custom_call.1} parent=11 // pred_fallthru
          _
        // Predicated region
        $region21: #{tpu_custom_call.1} parent=11 // pred_check
          %p319 = pneg %p115
        $region22: #{tpu_custom_call.1} parent=11 // pred_check_branch
          %321 = sbr.rel (%p319) target = $region24
        $region23: #{tpu_custom_call.1} parent=11 // pred_region
          %s323 = ssub.s32 1024, 1024
          %324 = vsyncadd [#allocation6], %s323
          %s325 = sshll.u32 [#allocation7], 4
          %s326 = int_to_ptr.vmem [resolvable:$true] %s325
          %331 = dma.hbm_to_vmem [thread:$0]  %s3, 1024, %s326, [#allocation6], 64, 64, 4
        $region24: #{tpu_custom_call.1} parent=11 // pred_fallthru
          _
        // Predicated region
        $region25: #{tpu_custom_call.1} parent=11 // pred_check
          %p332 = pneg %p136
        $region26: #{tpu_custom_call.1} parent=11 // pred_check_branch
          %334 = sbr.rel (%p332) target = $region28
        $region27: #{tpu_custom_call.1} parent=11 // pred_region
          _
        $region28: #{tpu_custom_call.1} parent=11 // pred_fallthru
          _
        // Predicated region
        $region29: #{tpu_custom_call.1} parent=11 // pred_check
          %p335 = pneg %p157
        $region30: #{tpu_custom_call.1} parent=11 // pred_check_branch
          %337 = sbr.rel (%p335) target = $region32
        $region31: #{tpu_custom_call.1} parent=11 // pred_region
          %s339 = ssub.s32 1024, 1024
          %340 = vsyncadd [#allocation9], %s339
          %s341 = sshll.u32 [#allocation8], 4
          %s342 = int_to_ptr.vmem [resolvable:$true] %s341
          %347 = dma.hbm_to_vmem [thread:$0]  %s5, 1024, %s342, [#allocation9], 64, 64, 4
        $region32: #{tpu_custom_call.1} parent=11 // pred_fallthru
          _
        // Predicated region
        $region33: #{tpu_custom_call.1} parent=11 // pred_check
          %p348 = pneg %p178
        $region34: #{tpu_custom_call.1} parent=11 // pred_check_branch
          %350 = sbr.rel (%p348) target = $region36
        $region35: #{tpu_custom_call.1} parent=11 // pred_region
          _
        $region36: #{tpu_custom_call.1} parent=11 // pred_fallthru
          _
        // Predicated region
        $region37: #{tpu_custom_call.1} parent=11 // pred_check
          %p351 = pneg %p199
        $region38: #{tpu_custom_call.1} parent=11 // pred_check_branch
          %353 = sbr.rel (%p351) target = $region40
        $region39: #{tpu_custom_call.1} parent=11 // pred_region
          %s355 = ssub.s32 1024, 1024
          %356 = vsyncadd [#allocation9], %s355
          %s357 = sshll.u32 [#allocation10], 4
          %s358 = int_to_ptr.vmem [resolvable:$true] %s357
          %363 = dma.hbm_to_vmem [thread:$0]  %s7, 1024, %s358, [#allocation9], 64, 64, 4
        $region40: #{tpu_custom_call.1} parent=11 // pred_fallthru
          _
        // Predicated region
        $region41: #{tpu_custom_call.1} parent=11 // pred_check
          %p364 = pneg %p220
        $region42: #{tpu_custom_call.1} parent=11 // pred_check_branch
          %366 = sbr.rel (%p364) target = $region44
        $region43: #{tpu_custom_call.1} parent=11 // pred_region
          _
        $region44: #{tpu_custom_call.1} parent=11 // pred_fallthru
          _
        // Predicated region
        $region45: #{tpu_custom_call.1} parent=11 // pred_check
          %p367 = pneg %p241
        $region46: #{tpu_custom_call.1} parent=11 // pred_check_branch
          %369 = sbr.rel (%p367) target = $region48
        $region47: #{tpu_custom_call.1} parent=11 // pred_region
          %s371 = ssub.s32 1024, 1024
          %372 = vsyncadd [#allocation12], %s371
          %s373 = sshll.u32 [#allocation11], 4
          %s374 = int_to_ptr.vmem [resolvable:$true] %s373
          %379 = dma.hbm_to_vmem [thread:$0]  %s9, 1024, %s374, [#allocation12], 64, 64, 4
        $region48: #{tpu_custom_call.1} parent=11 // pred_fallthru
          _
        // Predicated region
        $region49: #{tpu_custom_call.1} parent=11 // pred_check
          %p380 = pneg %p262
        $region50: #{tpu_custom_call.1} parent=11 // pred_check_branch
          %382 = sbr.rel (%p380) target = $region52
        $region51: #{tpu_custom_call.1} parent=11 // pred_region
          _
        $region52: #{tpu_custom_call.1} parent=11 // pred_fallthru
          _
      $region12: #{tpu_custom_call.1} parent=5 // pred_fallthru
        _
      %p383 = scmp.lt.s32.totalorder %s26, 2
      // Predicated region
      $region53: #{tpu_custom_call.1} parent=5 // pred_check
        %p384 = pneg %p383
      $region54: #{tpu_custom_call.1} parent=5 // pred_check_branch
        %386 = sbr.rel (%p384) target = $region56
      $region55: #{tpu_custom_call.1} parent=5 // pred_region
        // Predicated region
        $region57: #{tpu_custom_call.1} parent=55 // pred_check
          %p387 = pneg %p46
        $region58: #{tpu_custom_call.1} parent=55 // pred_check_branch
          %389 = sbr.rel (%p387) target = $region60
        $region59: #{tpu_custom_call.1} parent=55 // pred_region
          %s390 = sand.u32 %s36, 1
          %s391 = scalar_lea.sflag [#allocation3], %s390
          %s392 = sand.u32 %s36, 1
          %s393 = smul.addr %s392, 16
          %s394 = scalar_lea.vmem [#allocation2], %s393
          %s395 = smul.u32 2, %s26
          %s397 = ssub.s32 256, 256
          %398 = vsyncadd %s391, %s397
          %s399 = smul.addr %s395, 128
          %s400 = scalar_lea.hbm %s0, %s399
          %s401 = sshll.u32 %s394, 4
          %s402 = int_to_ptr.vmem [resolvable:$true] %s401
          %407 = dma.hbm_to_vmem [thread:$0]  %s400, 256, %s402, %s391, 128, 128, 8
        $region60: #{tpu_custom_call.1} parent=55 // pred_fallthru
          _
      $region56: #{tpu_custom_call.1} parent=5 // pred_fallthru
        _
      %p408 = scmp.le.s32.totalorder 1, %s26
      %p409 = scmp.lt.s32.totalorder %s26, 3
      %p410 = pnand %p408, %p409
      %p411 = pneg %p410
      // Predicated region
      $region61: #{tpu_custom_call.1} parent=5 // pred_check
        _
      $region62: #{tpu_custom_call.1} parent=5 // pred_check_branch
        %413 = sbr.rel (%p410) target = $region64
      $region63: #{tpu_custom_call.1} parent=5 // pred_region
        %s414 = ssub.s32 %s26, 1
        %s415 = sand.u32 %s39, 1
        %s416 = scalar_lea.sflag [#allocation3], %s415
        %s417 = sand.u32 %s39, 1
        %s418 = smul.addr %s417, 16
        %s419 = scalar_lea.vmem [#allocation2], %s418
        // Predicated region
        $region65: #{tpu_custom_call.1} parent=63 // pred_check
          %p420 = pneg %p52
        $region66: #{tpu_custom_call.1} parent=63 // pred_check_branch
          %422 = sbr.rel (%p420) target = $region68
        $region67: #{tpu_custom_call.1} parent=63 // pred_region
          %423 = dma.done %s416, 256
        $region68: #{tpu_custom_call.1} parent=63 // pred_fallthru
          _
        // Predicated region
        $region69: #{tpu_custom_call.1} parent=63 // pred_check
          %p424 = pneg %p73
        $region70: #{tpu_custom_call.1} parent=63 // pred_check_branch
          %426 = sbr.rel (%p424) target = $region72
        $region71: #{tpu_custom_call.1} parent=63 // pred_region
          %427 = dma.done [#allocation6], 256
        $region72: #{tpu_custom_call.1} parent=63 // pred_fallthru
          _
        // Predicated region
        $region73: #{tpu_custom_call.1} parent=63 // pred_check
          %p428 = pneg %p115
        $region74: #{tpu_custom_call.1} parent=63 // pred_check_branch
          %430 = sbr.rel (%p428) target = $region76
        $region75: #{tpu_custom_call.1} parent=63 // pred_region
          %431 = dma.done [#allocation6], 1024
        $region76: #{tpu_custom_call.1} parent=63 // pred_fallthru
          _
        // Predicated region
        $region77: #{tpu_custom_call.1} parent=63 // pred_check
          %p432 = pneg %p157
        $region78: #{tpu_custom_call.1} parent=63 // pred_check_branch
          %434 = sbr.rel (%p432) target = $region80
        $region79: #{tpu_custom_call.1} parent=63 // pred_region
          %435 = dma.done [#allocation9], 1024
        $region80: #{tpu_custom_call.1} parent=63 // pred_fallthru
          _
        // Predicated region
        $region81: #{tpu_custom_call.1} parent=63 // pred_check
          %p436 = pneg %p199
        $region82: #{tpu_custom_call.1} parent=63 // pred_check_branch
          %438 = sbr.rel (%p436) target = $region84
        $region83: #{tpu_custom_call.1} parent=63 // pred_region
          %439 = dma.done [#allocation9], 1024
        $region84: #{tpu_custom_call.1} parent=63 // pred_fallthru
          _
        // Predicated region
        $region85: #{tpu_custom_call.1} parent=63 // pred_check
          %p440 = pneg %p241
        $region86: #{tpu_custom_call.1} parent=63 // pred_check_branch
          %442 = sbr.rel (%p440) target = $region88
        $region87: #{tpu_custom_call.1} parent=63 // pred_region
          %443 = dma.done [#allocation12], 1024
        $region88: #{tpu_custom_call.1} parent=63 // pred_fallthru
          _
        %s444 = sand.u32 %s39, 1
        %s445 = scalar_lea.sflag [#allocation3], %s444
        %s446 = sand.u32 %s39, 1
        %s447 = smul.addr %s446, 16
        %s448 = scalar_lea.vmem [#allocation2], %s447
        %p449 = pneg %p52
        %p450 = pneg %p49
        %p451 = pneg %p73
        %p452 = pneg %p70
        %p453 = pneg %p94
        %p454 = pneg %p91
        %p455 = pneg %p115
        %p456 = pneg %p112
        %p457 = pneg %p136
        %p458 = pneg %p133
        %p459 = pneg %p157
        %p460 = pneg %p154
        %p461 = pneg %p178
        %p462 = pneg %p175
        %p463 = pneg %p199
        %p464 = pneg %p196
        %p465 = pneg %p220
        %p466 = pneg %p217
        %p467 = pneg %p241
        %p468 = pneg %p238
        %p469 = pneg %p262
        %p470 = pneg %p259
        %p471 = pneg %p288
        %p472 = pneg %p285
        %s473 = sand.u32 %s275, 1
        %s474 = scalar_lea.sflag [#allocation4], %s473
        %s475 = sand.u32 %s275, 1
        %s476 = smul.addr %s475, 16
        %s477 = scalar_lea.vmem [#allocation13], %s476
        %s478 = smul.u32 2, %s31
        %s479 = smul.u32 2, %s31
        %v481 = vld [vmem:[%s419] sm:$0xff]
        %v482 = vld [vmem:[%s419 + $0x8] sm:$0xff]
        %v483 = vpack.c.bf16 %v482, %v481
        %v484 = vld [vmem:[#allocation5] sm:$0xf]
        %v485 = vld [vmem:[#allocation5 + $0x4] sm:$0xf]
        %v486 = vld [vmem:[#allocation5 + $0x8] sm:$0xf]
        %v487 = vld [vmem:[#allocation5 + $0xc] sm:$0xf]
        %v488 = vld [vmem:[%s2] sm:$0x1]
        %v490 = vlaneseq
        %v491 = vshrl.u32 %v490, 7
        %v492 = vsub.s32 0, %v491
        %v493 = vrot.slane %v488, %v492
        %v499 = vunpack.c.l.b16 %v484
        %v500 = vunpack.c.l.b16 %v485
        %v501 = vunpack.c.l.b16 %v486
        %v502 = vunpack.c.l.b16 %v487
        %v503 = vpack.c.b16 %v500, %v499
        %v504 = vpack.c.b16 %v502, %v501
        %vm507 = vcmask 261120
        %v509 = vsel %vm507, %v483, 0
        %511 = vmatprep.subr.bf16.mxu0 0
        %512 = vmatpush1.bf16.msra.mxu0 0
        %513 = vmatprep.subr.bf16.mxu0 0
        %514 = vmatpush1.bf16.msra.mxu0 0
        %515 = vmatprep.subr.bf16.mxu0 0
        %516 = vmatpush1.bf16.msra.mxu0 0
        %517 = vmatprep.subr.bf16.mxu0 0
        %518 = vmatpush1.bf16.msra.mxu0 0
        %519 = vmatprep.subr.bf16.mxu0 0
        %520 = vmatpush1.bf16.msra.mxu0 0
        %521 = vmatprep.subr.bf16.mxu0 0
        %522 = vmatpush1.bf16.msra.mxu0 0
        %523 = vmatprep.subr.bf16.mxu0 0
        %524 = vmatpush1.bf16.msra.mxu0 %v504
        %525 = vmatprep.subr.bf16.mxu0 0
        %526 = vmatpush1.bf16.msra.mxu0 %v503
        %527 = vmatprep.subr.bf16.mxu0 0
        %528 = vmatpush2.bf16.msra.mxu0 0
        %529 = vmatprep.subr.bf16.mxu0 0
        %530 = vmatpush2.bf16.msra.mxu0 0
        %531 = vmatprep.subr.bf16.mxu0 0
        %532 = vmatpush2.bf16.msra.mxu0 0
        %533 = vmatprep.subr.bf16.mxu0 0
        %534 = vmatpush2.bf16.msra.mxu0 0
        %535 = vmatprep.subr.bf16.mxu0 0
        %536 = vmatpush2.bf16.msra.mxu0 0
        %537 = vmatprep.subr.bf16.mxu0 0
        %538 = vmatpush2.bf16.msra.mxu0 0
        %539 = vmatprep.subr.bf16.mxu0 0
        %540 = vmatpush2.bf16.msra.mxu0 0
        %541 = vmatprep.subr.bf16.mxu0 0
        %542 = vmatpush2.bf16.msra.mxu0 0
        %543 = vmatprep.mubr.bf16.mxu0 0
        %544 = vmatmul.mubr.bf16.gmra.mxu0 %v509
        %v545 = vpop.f32.mrf.mxu0
        %v546 = vadd.f32 %v493, %v545
        %v547 = vpop.f32.mrf.mxu0
        %v548 = vpop.f32.mrf.mxu0
        %v549 = vadd.f32 %v493, %v548
        %v550 = vpop.f32.mrf.mxu0
        %551 = vdwg.mxu0
        %v552 = vmax.f32 %v546, 0.0
        %v553 = vmax.f32 %v549, 0.0
        %v554 = vpack.c.bf16 %v553, %v552
        %v555 = vld [vmem:[#allocation7] sm:$0xf]
        %v556 = vld [vmem:[#allocation7 + $0x4] sm:$0xf]
        %v557 = vld [vmem:[#allocation7 + $0x8] sm:$0xf]
        %v558 = vld [vmem:[#allocation7 + $0xc] sm:$0xf]
        %v559 = vld [vmem:[#allocation7 + $0x10] sm:$0xf]
        %v560 = vld [vmem:[#allocation7 + $0x14] sm:$0xf]
        %v561 = vld [vmem:[#allocation7 + $0x18] sm:$0xf]
        %v562 = vld [vmem:[#allocation7 + $0x1c] sm:$0xf]
        %v563 = vld [vmem:[#allocation7 + $0x20] sm:$0xf]
        %v564 = vld [vmem:[#allocation7 + $0x24] sm:$0xf]
        %v565 = vld [vmem:[#allocation7 + $0x28] sm:$0xf]
        %v566 = vld [vmem:[#allocation7 + $0x2c] sm:$0xf]
        %v567 = vld [vmem:[#allocation7 + $0x30] sm:$0xf]
        %v568 = vld [vmem:[#allocation7 + $0x34] sm:$0xf]
        %v569 = vld [vmem:[#allocation7 + $0x38] sm:$0xf]
        %v570 = vld [vmem:[#allocation7 + $0x3c] sm:$0xf]
        %v571 = vld [vmem:[%s4] sm:$0x1]
        %v573 = vlaneseq
        %v574 = vshrl.u32 %v573, 7
        %v575 = vsub.s32 0, %v574
        %v576 = vrot.slane %v571, %v575
        %v594 = vunpack.c.l.b16 %v555
        %v595 = vunpack.c.l.b16 %v556
        %v596 = vunpack.c.l.b16 %v557
        %v597 = vunpack.c.l.b16 %v558
        %v598 = vunpack.c.l.b16 %v559
        %v599 = vunpack.c.l.b16 %v560
        %v600 = vunpack.c.l.b16 %v561
        %v601 = vunpack.c.l.b16 %v562
        %v602 = vunpack.c.l.b16 %v563
        %v603 = vunpack.c.l.b16 %v564
        %v604 = vunpack.c.l.b16 %v565
        %v605 = vunpack.c.l.b16 %v566
        %v606 = vunpack.c.l.b16 %v567
        %v607 = vunpack.c.l.b16 %v568
        %v608 = vunpack.c.l.b16 %v569
        %v609 = vunpack.c.l.b16 %v570
        %v610 = vpack.c.b16 %v595, %v594
        %v611 = vpack.c.b16 %v597, %v596
        %v612 = vpack.c.b16 %v599, %v598
        %v613 = vpack.c.b16 %v601, %v600
        %v614 = vpack.c.b16 %v603, %v602
        %v615 = vpack.c.b16 %v605, %v604
        %v616 = vpack.c.b16 %v607, %v606
        %v617 = vpack.c.b16 %v609, %v608
        %626 = vmatprep.subr.bf16.mxu0 0
        %627 = vmatpush1.bf16.msra.mxu0 %v617
        %628 = vmatprep.subr.bf16.mxu0 0
        %629 = vmatpush1.bf16.msra.mxu0 %v616
        %630 = vmatprep.subr.bf16.mxu0 0
        %631 = vmatpush1.bf16.msra.mxu0 %v615
        %632 = vmatprep.subr.bf16.mxu0 0
        %633 = vmatpush1.bf16.msra.mxu0 %v614
        %634 = vmatprep.subr.bf16.mxu0 0
        %635 = vmatpush1.bf16.msra.mxu0 %v613
        %636 = vmatprep.subr.bf16.mxu0 0
        %637 = vmatpush1.bf16.msra.mxu0 %v612
        %638 = vmatprep.subr.bf16.mxu0 0
        %639 = vmatpush1.bf16.msra.mxu0 %v611
        %640 = vmatprep.subr.bf16.mxu0 0
        %641 = vmatpush1.bf16.msra.mxu0 %v610
        %642 = vmatprep.subr.bf16.mxu0 0
        %643 = vmatpush2.bf16.msra.mxu0 0
        %644 = vmatprep.subr.bf16.mxu0 0
        %645 = vmatpush2.bf16.msra.mxu0 0
        %646 = vmatprep.subr.bf16.mxu0 0
        %647 = vmatpush2.bf16.msra.mxu0 0
        %648 = vmatprep.subr.bf16.mxu0 0
        %649 = vmatpush2.bf16.msra.mxu0 0
        %650 = vmatprep.subr.bf16.mxu0 0
        %651 = vmatpush2.bf16.msra.mxu0 0
        %652 = vmatprep.subr.bf16.mxu0 0
        %653 = vmatpush2.bf16.msra.mxu0 0
        %654 = vmatprep.subr.bf16.mxu0 0
        %655 = vmatpush2.bf16.msra.mxu0 0
        %656 = vmatprep.subr.bf16.mxu0 0
        %657 = vmatpush2.bf16.msra.mxu0 0
        %658 = vmatprep.mubr.bf16.mxu0 0
        %659 = vmatmul.mubr.bf16.gmra.mxu0 %v554
        %v660 = vpop.f32.mrf.mxu0
        %v661 = vadd.f32 %v576, %v660
        %v662 = vpop.f32.mrf.mxu0
        %v663 = vpop.f32.mrf.mxu0
        %v664 = vadd.f32 %v576, %v663
        %v665 = vpop.f32.mrf.mxu0
        %666 = vdwg.mxu0
        %v667 = vmax.f32 %v661, 0.0
        %v668 = vmax.f32 %v664, 0.0
        %v669 = vpack.c.bf16 %v668, %v667
        %v670 = vld [vmem:[#allocation8] sm:$0xf]
        %v671 = vld [vmem:[#allocation8 + $0x4] sm:$0xf]
        %v672 = vld [vmem:[#allocation8 + $0x8] sm:$0xf]
        %v673 = vld [vmem:[#allocation8 + $0xc] sm:$0xf]
        %v674 = vld [vmem:[#allocation8 + $0x10] sm:$0xf]
        %v675 = vld [vmem:[#allocation8 + $0x14] sm:$0xf]
        %v676 = vld [vmem:[#allocation8 + $0x18] sm:$0xf]
        %v677 = vld [vmem:[#allocation8 + $0x1c] sm:$0xf]
        %v678 = vld [vmem:[#allocation8 + $0x20] sm:$0xf]
        %v679 = vld [vmem:[#allocation8 + $0x24] sm:$0xf]
        %v680 = vld [vmem:[#allocation8 + $0x28] sm:$0xf]
        %v681 = vld [vmem:[#allocation8 + $0x2c] sm:$0xf]
        %v682 = vld [vmem:[#allocation8 + $0x30] sm:$0xf]
        %v683 = vld [vmem:[#allocation8 + $0x34] sm:$0xf]
        %v684 = vld [vmem:[#allocation8 + $0x38] sm:$0xf]
        %v685 = vld [vmem:[#allocation8 + $0x3c] sm:$0xf]
        %v686 = vld [vmem:[%s6] sm:$0x1]
        %v688 = vlaneseq
        %v689 = vshrl.u32 %v688, 7
        %v690 = vsub.s32 0, %v689
        %v691 = vrot.slane %v686, %v690
        %v709 = vunpack.c.l.b16 %v670
        %v710 = vunpack.c.l.b16 %v671
        %v711 = vunpack.c.l.b16 %v672
        %v712 = vunpack.c.l.b16 %v673
        %v713 = vunpack.c.l.b16 %v674
        %v714 = vunpack.c.l.b16 %v675
        %v715 = vunpack.c.l.b16 %v676
        %v716 = vunpack.c.l.b16 %v677
        %v717 = vunpack.c.l.b16 %v678
        %v718 = vunpack.c.l.b16 %v679
        %v719 = vunpack.c.l.b16 %v680
        %v720 = vunpack.c.l.b16 %v681
        %v721 = vunpack.c.l.b16 %v682
        %v722 = vunpack.c.l.b16 %v683
        %v723 = vunpack.c.l.b16 %v684
        %v724 = vunpack.c.l.b16 %v685
        %v725 = vpack.c.b16 %v710, %v709
        %v726 = vpack.c.b16 %v712, %v711
        %v727 = vpack.c.b16 %v714, %v713
        %v728 = vpack.c.b16 %v716, %v715
        %v729 = vpack.c.b16 %v718, %v717
        %v730 = vpack.c.b16 %v720, %v719
        %v731 = vpack.c.b16 %v722, %v721
        %v732 = vpack.c.b16 %v724, %v723
        %741 = vmatprep.subr.bf16.mxu0 0
        %742 = vmatpush1.bf16.msra.mxu0 %v732
        %743 = vmatprep.subr.bf16.mxu0 0
        %744 = vmatpush1.bf16.msra.mxu0 %v731
        %745 = vmatprep.subr.bf16.mxu0 0
        %746 = vmatpush1.bf16.msra.mxu0 %v730
        %747 = vmatprep.subr.bf16.mxu0 0
        %748 = vmatpush1.bf16.msra.mxu0 %v729
        %749 = vmatprep.subr.bf16.mxu0 0
        %750 = vmatpush1.bf16.msra.mxu0 %v728
        %751 = vmatprep.subr.bf16.mxu0 0
        %752 = vmatpush1.bf16.msra.mxu0 %v727
        %753 = vmatprep.subr.bf16.mxu0 0
        %754 = vmatpush1.bf16.msra.mxu0 %v726
        %755 = vmatprep.subr.bf16.mxu0 0
        %756 = vmatpush1.bf16.msra.mxu0 %v725
        %757 = vmatprep.subr.bf16.mxu0 0
        %758 = vmatpush2.bf16.msra.mxu0 0
        %759 = vmatprep.subr.bf16.mxu0 0
        %760 = vmatpush2.bf16.msra.mxu0 0
        %761 = vmatprep.subr.bf16.mxu0 0
        %762 = vmatpush2.bf16.msra.mxu0 0
        %763 = vmatprep.subr.bf16.mxu0 0
        %764 = vmatpush2.bf16.msra.mxu0 0
        %765 = vmatprep.subr.bf16.mxu0 0
        %766 = vmatpush2.bf16.msra.mxu0 0
        %767 = vmatprep.subr.bf16.mxu0 0
        %768 = vmatpush2.bf16.msra.mxu0 0
        %769 = vmatprep.subr.bf16.mxu0 0
        %770 = vmatpush2.bf16.msra.mxu0 0
        %771 = vmatprep.subr.bf16.mxu0 0
        %772 = vmatpush2.bf16.msra.mxu0 0
        %773 = vmatprep.mubr.bf16.mxu0 0
        %774 = vmatmul.mubr.bf16.gmra.mxu0 %v669
        %v775 = vpop.f32.mrf.mxu0
        %v776 = vadd.f32 %v691, %v775
        %v777 = vpop.f32.mrf.mxu0
        %v778 = vpop.f32.mrf.mxu0
        %v779 = vadd.f32 %v691, %v778
        %v780 = vpop.f32.mrf.mxu0
        %781 = vdwg.mxu0
        %v782 = vmax.f32 %v776, 0.0
        %v783 = vmax.f32 %v779, 0.0
        %v784 = vpack.c.bf16 %v783, %v782
        %v785 = vld [vmem:[#allocation10] sm:$0xf]
        %v786 = vld [vmem:[#allocation10 + $0x4] sm:$0xf]
        %v787 = vld [vmem:[#allocation10 + $0x8] sm:$0xf]
        %v788 = vld [vmem:[#allocation10 + $0xc] sm:$0xf]
        %v789 = vld [vmem:[#allocation10 + $0x10] sm:$0xf]
        %v790 = vld [vmem:[#allocation10 + $0x14] sm:$0xf]
        %v791 = vld [vmem:[#allocation10 + $0x18] sm:$0xf]
        %v792 = vld [vmem:[#allocation10 + $0x1c] sm:$0xf]
        %v793 = vld [vmem:[#allocation10 + $0x20] sm:$0xf]
        %v794 = vld [vmem:[#allocation10 + $0x24] sm:$0xf]
        %v795 = vld [vmem:[#allocation10 + $0x28] sm:$0xf]
        %v796 = vld [vmem:[#allocation10 + $0x2c] sm:$0xf]
        %v797 = vld [vmem:[#allocation10 + $0x30] sm:$0xf]
        %v798 = vld [vmem:[#allocation10 + $0x34] sm:$0xf]
        %v799 = vld [vmem:[#allocation10 + $0x38] sm:$0xf]
        %v800 = vld [vmem:[#allocation10 + $0x3c] sm:$0xf]
        %v801 = vld [vmem:[%s8] sm:$0x1]
        %v803 = vlaneseq
        %v804 = vshrl.u32 %v803, 7
        %v805 = vsub.s32 0, %v804
        %v806 = vrot.slane %v801, %v805
        %v824 = vunpack.c.l.b16 %v785
        %v825 = vunpack.c.l.b16 %v786
        %v826 = vunpack.c.l.b16 %v787
        %v827 = vunpack.c.l.b16 %v788
        %v828 = vunpack.c.l.b16 %v789
        %v829 = vunpack.c.l.b16 %v790
        %v830 = vunpack.c.l.b16 %v791
        %v831 = vunpack.c.l.b16 %v792
        %v832 = vunpack.c.l.b16 %v793
        %v833 = vunpack.c.l.b16 %v794
        %v834 = vunpack.c.l.b16 %v795
        %v835 = vunpack.c.l.b16 %v796
        %v836 = vunpack.c.l.b16 %v797
        %v837 = vunpack.c.l.b16 %v798
        %v838 = vunpack.c.l.b16 %v799
        %v839 = vunpack.c.l.b16 %v800
        %v840 = vpack.c.b16 %v825, %v824
        %v841 = vpack.c.b16 %v827, %v826
        %v842 = vpack.c.b16 %v829, %v828
        %v843 = vpack.c.b16 %v831, %v830
        %v844 = vpack.c.b16 %v833, %v832
        %v845 = vpack.c.b16 %v835, %v834
        %v846 = vpack.c.b16 %v837, %v836
        %v847 = vpack.c.b16 %v839, %v838
        %856 = vmatprep.subr.bf16.mxu0 0
        %857 = vmatpush1.bf16.msra.mxu0 %v847
        %858 = vmatprep.subr.bf16.mxu0 0
        %859 = vmatpush1.bf16.msra.mxu0 %v846
        %860 = vmatprep.subr.bf16.mxu0 0
        %861 = vmatpush1.bf16.msra.mxu0 %v845
        %862 = vmatprep.subr.bf16.mxu0 0
        %863 = vmatpush1.bf16.msra.mxu0 %v844
        %864 = vmatprep.subr.bf16.mxu0 0
        %865 = vmatpush1.bf16.msra.mxu0 %v843
        %866 = vmatprep.subr.bf16.mxu0 0
        %867 = vmatpush1.bf16.msra.mxu0 %v842
        %868 = vmatprep.subr.bf16.mxu0 0
        %869 = vmatpush1.bf16.msra.mxu0 %v841
        %870 = vmatprep.subr.bf16.mxu0 0
        %871 = vmatpush1.bf16.msra.mxu0 %v840
        %872 = vmatprep.subr.bf16.mxu0 0
        %873 = vmatpush2.bf16.msra.mxu0 0
        %874 = vmatprep.subr.bf16.mxu0 0
        %875 = vmatpush2.bf16.msra.mxu0 0
        %876 = vmatprep.subr.bf16.mxu0 0
        %877 = vmatpush2.bf16.msra.mxu0 0
        %878 = vmatprep.subr.bf16.mxu0 0
        %879 = vmatpush2.bf16.msra.mxu0 0
        %880 = vmatprep.subr.bf16.mxu0 0
        %881 = vmatpush2.bf16.msra.mxu0 0
        %882 = vmatprep.subr.bf16.mxu0 0
        %883 = vmatpush2.bf16.msra.mxu0 0
        %884 = vmatprep.subr.bf16.mxu0 0
        %885 = vmatpush2.bf16.msra.mxu0 0
        %886 = vmatprep.subr.bf16.mxu0 0
        %887 = vmatpush2.bf16.msra.mxu0 0
        %888 = vmatprep.mubr.bf16.mxu0 0
        %889 = vmatmul.mubr.bf16.gmra.mxu0 %v784
        %v890 = vpop.f32.mrf.mxu0
        %v891 = vadd.f32 %v806, %v890
        %v892 = vpop.f32.mrf.mxu0
        %v893 = vpop.f32.mrf.mxu0
        %v894 = vadd.f32 %v806, %v893
        %v895 = vpop.f32.mrf.mxu0
        %896 = vdwg.mxu0
        %v897 = vmax.f32 %v891, 0.0
        %v898 = vmax.f32 %v894, 0.0
        %v899 = vpack.c.bf16 %v898, %v897
        %v900 = vld [vmem:[#allocation11] sm:$0xf]
        %v901 = vld [vmem:[#allocation11 + $0x4] sm:$0xf]
        %v902 = vld [vmem:[#allocation11 + $0x8] sm:$0xf]
        %v903 = vld [vmem:[#allocation11 + $0xc] sm:$0xf]
        %v904 = vld [vmem:[#allocation11 + $0x10] sm:$0xf]
        %v905 = vld [vmem:[#allocation11 + $0x14] sm:$0xf]
        %v906 = vld [vmem:[#allocation11 + $0x18] sm:$0xf]
        %v907 = vld [vmem:[#allocation11 + $0x1c] sm:$0xf]
        %v908 = vld [vmem:[#allocation11 + $0x20] sm:$0xf]
        %v909 = vld [vmem:[#allocation11 + $0x24] sm:$0xf]
        %v910 = vld [vmem:[#allocation11 + $0x28] sm:$0xf]
        %v911 = vld [vmem:[#allocation11 + $0x2c] sm:$0xf]
        %v912 = vld [vmem:[#allocation11 + $0x30] sm:$0xf]
        %v913 = vld [vmem:[#allocation11 + $0x34] sm:$0xf]
        %v914 = vld [vmem:[#allocation11 + $0x38] sm:$0xf]
        %v915 = vld [vmem:[#allocation11 + $0x3c] sm:$0xf]
        %v916 = vld [vmem:[%s10] sm:$0x1]
        %v918 = vlaneseq
        %v919 = vshrl.u32 %v918, 7
        %v920 = vsub.s32 0, %v919
        %v921 = vrot.slane %v916, %v920
        %v939 = vunpack.c.l.b16 %v900
        %v940 = vunpack.c.l.b16 %v901
        %v941 = vunpack.c.l.b16 %v902
        %v942 = vunpack.c.l.b16 %v903
        %v943 = vunpack.c.l.b16 %v904
        %v944 = vunpack.c.l.b16 %v905
        %v945 = vunpack.c.l.b16 %v906
        %v946 = vunpack.c.l.b16 %v907
        %v947 = vunpack.c.l.b16 %v908
        %v948 = vunpack.c.l.b16 %v909
        %v949 = vunpack.c.l.b16 %v910
        %v950 = vunpack.c.l.b16 %v911
        %v951 = vunpack.c.l.b16 %v912
        %v952 = vunpack.c.l.b16 %v913
        %v953 = vunpack.c.l.b16 %v914
        %v954 = vunpack.c.l.b16 %v915
        %v955 = vpack.c.b16 %v940, %v939
        %v956 = vpack.c.b16 %v942, %v941
        %v957 = vpack.c.b16 %v944, %v943
        %v958 = vpack.c.b16 %v946, %v945
        %v959 = vpack.c.b16 %v948, %v947
        %v960 = vpack.c.b16 %v950, %v949
        %v961 = vpack.c.b16 %v952, %v951
        %v962 = vpack.c.b16 %v954, %v953
        %971 = vmatprep.subr.bf16.mxu0 0
        %972 = vmatpush1.bf16.msra.mxu0 %v962
        %973 = vmatprep.subr.bf16.mxu0 0
        %974 = vmatpush1.bf16.msra.mxu0 %v961
        %975 = vmatprep.subr.bf16.mxu0 0
        %976 = vmatpush1.bf16.msra.mxu0 %v960
        %977 = vmatprep.subr.bf16.mxu0 0
        %978 = vmatpush1.bf16.msra.mxu0 %v959
        %979 = vmatprep.subr.bf16.mxu0 0
        %980 = vmatpush1.bf16.msra.mxu0 %v958
        %981 = vmatprep.subr.bf16.mxu0 0
        %982 = vmatpush1.bf16.msra.mxu0 %v957
        %983 = vmatprep.subr.bf16.mxu0 0
        %984 = vmatpush1.bf16.msra.mxu0 %v956
        %985 = vmatprep.subr.bf16.mxu0 0
        %986 = vmatpush1.bf16.msra.mxu0 %v955
        %987 = vmatprep.subr.bf16.mxu0 0
        %988 = vmatpush2.bf16.msra.mxu0 0
        %989 = vmatprep.subr.bf16.mxu0 0
        %990 = vmatpush2.bf16.msra.mxu0 0
        %991 = vmatprep.subr.bf16.mxu0 0
        %992 = vmatpush2.bf16.msra.mxu0 0
        %993 = vmatprep.subr.bf16.mxu0 0
        %994 = vmatpush2.bf16.msra.mxu0 0
        %995 = vmatprep.subr.bf16.mxu0 0
        %996 = vmatpush2.bf16.msra.mxu0 0
        %997 = vmatprep.subr.bf16.mxu0 0
        %998 = vmatpush2.bf16.msra.mxu0 0
        %999 = vmatprep.subr.bf16.mxu0 0
        %1000 = vmatpush2.bf16.msra.mxu0 0
        %1001 = vmatprep.subr.bf16.mxu0 0
        %1002 = vmatpush2.bf16.msra.mxu0 0
        %1003 = vmatprep.mubr.bf16.mxu0 0
        %1004 = vmatmul.mubr.bf16.gmra.mxu0 %v899
        %v1005 = vpop.f32.mrf.mxu0
        %v1006 = vadd.f32 %v921, %v1005
        %v1007 = vpop.f32.mrf.mxu0
        %v1008 = vpop.f32.mrf.mxu0
        %v1009 = vadd.f32 %v921, %v1008
        %v1010 = vpop.f32.mrf.mxu0
        %1011 = vdwg.mxu0
        %1012 = vst [vmem:[%s477] sm:$0xff] %v1006
        %1013 = vst [vmem:[%s477 + $0x8] sm:$0xff] %v1009
        %s1014 = sand.u32 %s275, 1
        %s1015 = scalar_lea.sflag [#allocation4], %s1014
        %s1016 = sand.u32 %s275, 1
        %s1017 = smul.addr %s1016, 16
        %s1018 = scalar_lea.vmem [#allocation13], %s1017
        // Predicated region
        $region89: #{tpu_custom_call.1} parent=63 // pred_check
          %p1019 = pneg %p285
        $region90: #{tpu_custom_call.1} parent=63 // pred_check_branch
          %1021 = sbr.rel (%p1019) target = $region92
        $region91: #{tpu_custom_call.1} parent=63 // pred_region
          %s1022 = smul.u32 2, %s31
          %s1024 = ssub.s32 256, 256
          %1025 = vsyncadd %s1015, %s1024
          %s1026 = smul.addr %s1022, 128
          %s1027 = scalar_lea.hbm %s11, %s1026
          %s1028 = sshll.u32 %s1018, 4
          %s1029 = int_to_ptr.vmem [resolvable:$true] %s1028
          %1034 = dma.vmem_to_hbm [thread:$0]  %s1029, 256, %s1027, %s1015, 128, 128, 8
        $region92: #{tpu_custom_call.1} parent=63 // pred_fallthru
          _
      $region64: #{tpu_custom_call.1} parent=5 // pred_fallthru
        _
      %p1035 = scmp.le.s32.totalorder 2, %s26
      // Predicated region
      $region93: #{tpu_custom_call.1} parent=5 // pred_check
        %p1036 = pneg %p1035
      $region94: #{tpu_custom_call.1} parent=5 // pred_check_branch
        %1038 = sbr.rel (%p1036) target = $region96
      $region95: #{tpu_custom_call.1} parent=5 // pred_region
        %s1039 = ssub.s32 %s26, 2
        // Predicated region
        $region97: #{tpu_custom_call.1} parent=95 // pred_check
          %p1040 = pneg %p291
        $region98: #{tpu_custom_call.1} parent=95 // pred_check_branch
          %1042 = sbr.rel (%p1040) target = $region100
        $region99: #{tpu_custom_call.1} parent=95 // pred_region
          %s1043 = sand.u32 %s276, 1
          %s1044 = scalar_lea.sflag [#allocation4], %s1043
          %s1045 = sand.u32 %s276, 1
          %s1046 = smul.addr %s1045, 16
          %s1047 = scalar_lea.vmem [#allocation13], %s1046
          %1048 = dma.done %s1044, 256
        $region100: #{tpu_custom_call.1} parent=95 // pred_fallthru
          _
      $region96: #{tpu_custom_call.1} parent=5 // pred_fallthru
        _
    $region6: #{tpu_custom_call.1} parent=1 // loop_footer
      %s30 = sadd.s32 1, %s26
    $region7: #{tpu_custom_call.1} parent=1 // loop_footer_branch
      %25 = sbr.rel target = $region3
    $region8: #{tpu_custom_call.1} parent=1 // loop_exit
      _
    %1049 = vsyncpa [#allocation3], 1
    %s1050 = scalar_lea.sflag [#allocation3], 1
    %1051 = vsyncpa %s1050, 1
    %1052 = vsyncpa [#allocation6], 1
    %1053 = vsyncpa [#allocation9], 1
    %1054 = vsyncpa [#allocation12], 1
    %1055 = vsyncpa [#allocation4], 1
    %s1056 = scalar_lea.sflag [#allocation4], 1
    %1057 = vsyncpa %s1056, 1

</llo_original>
